<compile_context>
chip_gen: v7x
topology: tpu7x:2x2x1
jax: 0.10.0
libtpu: 0.0.40
codegen_flags: <defaults>
</compile_context>

<pallas_src>
import functools

import jax
import jax.numpy as jnp
from jax.experimental import pallas as pl
from jax.experimental.pallas import tpu as pltpu

IGNORE_INDEX = -100
_NEG = -1e30  # finite "minus infinity": keeps masked cols NaN-free through exp/log
_MiB = 1024 * 1024


def _round_up(x, m):
    return ((x + m - 1) // m) * m


def _round_down(x, m):
    return (x // m) * m


@functools.lru_cache(maxsize=1)
def _vmem_capacity_bytes():
    """Physical VMEM bytes of the local TPU; conservative fallback if unknown."""
    try:
        return int(pltpu.get_tpu_info().vmem_capacity_bytes)
    except Exception:
        return 64 * _MiB  # assume the smallest current generation (v7x per-TC VMEM)


def _auto_budgets():
    """(per-buffer logits tile budget, vmem_limit_bytes) for this TPU generation."""
    cap = _vmem_capacity_bytes()
    if cap >= 96 * _MiB:            # v5e / v6e: 128 MiB physical VMEM
        return 16 * _MiB, 64 * _MiB
    return 8 * _MiB, 48 * _MiB      # v7x: 64 MiB per TensorCore; leave ~16 MiB headroom


def _choose_tiles(n_rows, n_cols, dtype_bytes, budget):
    """Pick (tile_m, tile_c) so one logits tile fits `budget` bytes per pipeline buffer."""
    if n_cols * dtype_bytes * 64 <= budget or n_cols <= 128:
        tile_c = n_cols  # full class dim resident (last block dim == full array dim)
    else:
        # chunk the class axis in multiples of 128 lanes
        tile_c = min(
            _round_up(n_cols, 128),
            max(128, _round_down(budget // (64 * dtype_bytes), 128)),
            2048,
        )
    tile_m = budget // (tile_c * dtype_bytes)
    tile_m = min(tile_m, 2048, _round_up(n_rows, 8))
    # Guarantee >= 2 row blocks so the "parallel" row axis can feed both v7x TensorCores.
    if n_rows > 8:
        tile_m = min(tile_m, _round_up(pl.cdiv(n_rows, 2), 8))
    tile_m = max(8, _round_down(tile_m, 8))
    return tile_m, tile_c


def _ce_kernel_fullc(x_ref, t_ref, out_ref, *, n_rows, tile_m, need_row_mask):
    """Full-class-dim (single chunk) cross entropy: no scratch, no online rescale."""
    x = x_ref[...].astype(jnp.float32)                        # (TM, C)
    t = t_ref[...]                                            # (TM, 1) int32

    m = jnp.max(x, axis=-1, keepdims=True)
    s = jnp.sum(jnp.exp(x - m), axis=-1, keepdims=True)
    lse = jnp.log(s) + m

    col = jax.lax.broadcasted_iota(jnp.int32, x.shape, 1)
    picked = jnp.sum(jnp.where(col == t, x, 0.0), axis=-1, keepdims=True)

    valid = t != IGNORE_INDEX                                 # ignore_index never matches
    if need_row_mask:
        rrow = (jax.lax.broadcasted_iota(jnp.int32, t.shape, 0)
                + pl.program_id(0) * tile_m)
        valid = valid & (rrow < n_rows)
    # jnp.where (not multiply): padded tail rows may hold NaN/inf garbage.
    loss = jnp.where(valid, lse - picked, 0.0)
    out_ref[...] = jnp.sum(loss).reshape(1, 1, 1)


def _ce_kernel_chunked(x_ref, t_ref, out_ref, m_ref, s_ref, p_ref, *,
                       n_rows, n_cols, tile_m, tile_c,
                       need_row_mask, need_col_mask):
    """Online-logsumexp cross entropy with the class axis chunked.

    x_ref : (TM, TC) logits chunk (any float dtype; upcast to f32 here)
    t_ref : (TM, 1)  int32 targets
    out_ref: (1, 1, 1) f32 partial loss-sum for this row block
    m_ref/s_ref/p_ref: (TM,1) f32 scratch: running max, running sum-exp, picked logit
    """
    i = pl.program_id(0)      # row-block index      ("parallel")
    j = pl.program_id(1)      # class-chunk index    ("arbitrary" reduction)
    nj = pl.num_programs(1)

    @pl.when(j == 0)
    def _():
        m_ref[...] = jnp.full_like(m_ref, _NEG)
        s_ref[...] = jnp.zeros_like(s_ref)
        p_ref[...] = jnp.zeros_like(p_ref)

    x = x_ref[...].astype(jnp.float32)                        # (TM, TC)
    t = t_ref[...]                                            # (TM, 1)

    # Lane-local column index (no "+ j*tile_c" full-tile add); reused by both the
    # optional tail mask and the target pick.
    col_local = jax.lax.broadcasted_iota(jnp.int32, x.shape, 1)
    if need_col_mask:
        # Only emitted when C % tile_c != 0.  Interior chunks see an all-true predicate;
        # garbage columns past C in the tail chunk become -1e30 so they never win the max
        # and exp() underflows to 0 (no NaNs).
        x = jnp.where(col_local < (n_cols - j * tile_c), x, _NEG)

    # online logsumexp across class chunks
    m_prev = m_ref[...]
    m_new = jnp.maximum(m_prev, jnp.max(x, axis=-1, keepdims=True))
    s_ref[...] = (s_ref[...] * jnp.exp(m_prev - m_new)
                  + jnp.sum(jnp.exp(x - m_new), axis=-1, keepdims=True))
    m_ref[...] = m_new

    # pred[i, target[i]] via compare against the chunk-local target index; ignore_index
    # (-100) is always negative locally, so it never matches any column.
    t_local = t - j * tile_c
    p_ref[...] += jnp.sum(jnp.where(col_local == t_local, x, 0.0),
                          axis=-1, keepdims=True)

    @pl.when(j == nj - 1)
    def _():
        lse = jnp.log(s_ref[...]) + m_ref[...]                # (TM, 1)
        valid = t != IGNORE_INDEX
        if need_row_mask:
            rrow = jax.lax.broadcasted_iota(jnp.int32, t.shape, 0) + i * tile_m
            valid = valid & (rrow < n_rows)
        # jnp.where (not multiply): padded tail rows may hold NaN/inf garbage.
        loss = jnp.where(valid, lse - p_ref[...], 0.0)
        out_ref[...] = jnp.sum(loss).reshape(1, 1, 1)


@functools.partial(jax.jit, static_argnames=("vmem_tile_bytes",))
def cross_entropy_loss(pred, target, *, vmem_tile_bytes=None):
    """Mean CE over pred.view(-1, C) / target.view(-1) with ignore_index=-100."""
    C = pred.shape[-1]
    x = pred.reshape(-1, C)                     # keep HBM dtype (bf16 stays bf16)
    t = target.reshape(-1).astype(jnp.int32)
    N = x.shape[0]

    auto_tile, vmem_limit = _auto_budgets()
    budget = auto_tile if vmem_tile_bytes is None else vmem_tile_bytes
    tile_m, tile_c = _choose_tiles(N, C, x.dtype.itemsize, budget)
    grid_rows = pl.cdiv(N, tile_m)
    grid_cols = pl.cdiv(C, tile_c)
    need_row_mask = (N % tile_m) != 0
    need_col_mask = (C % tile_c) != 0

    out_shape = jax.ShapeDtypeStruct((grid_rows, 1, 1), jnp.float32)
    t2 = t.reshape(N, 1)

    if grid_cols == 1:
        kernel = functools.partial(_ce_kernel_fullc, n_rows=N, tile_m=tile_m,
                                   need_row_mask=need_row_mask)
        partials = pl.pallas_call(
            kernel,
            out_shape=out_shape,
            grid_spec=pltpu.PrefetchScalarGridSpec(
                num_scalar_prefetch=0,
                grid=(grid_rows,),
                in_specs=[
                    pl.BlockSpec((tile_m, tile_c), lambda i: (i, 0)),
                    pl.BlockSpec((tile_m, 1), lambda i: (i, 0)),
                ],
                out_specs=pl.BlockSpec((1, 1, 1), lambda i: (i, 0, 0)),
            ),
            compiler_params=pltpu.CompilerParams(
                dimension_semantics=("parallel",),
                vmem_limit_bytes=vmem_limit,
            ),
        )(x, t2)
    else:
        kernel = functools.partial(_ce_kernel_chunked, n_rows=N, n_cols=C,
                                   tile_m=tile_m, tile_c=tile_c,
                                   need_row_mask=need_row_mask,
                                   need_col_mask=need_col_mask)
        partials = pl.pallas_call(
            kernel,
            out_shape=out_shape,
            grid_spec=pltpu.PrefetchScalarGridSpec(
                num_scalar_prefetch=0,
                grid=(grid_rows, grid_cols),
                in_specs=[
                    pl.BlockSpec((tile_m, tile_c), lambda i, j: (i, j)),
                    pl.BlockSpec((tile_m, 1), lambda i, j: (i, 0)),
                ],
                out_specs=pl.BlockSpec((1, 1, 1), lambda i, j: (i, 0, 0)),
                scratch_shapes=[
                    pltpu.VMEM((tile_m, 1), jnp.float32),   # running max
                    pltpu.VMEM((tile_m, 1), jnp.float32),   # running sum-exp
                    pltpu.VMEM((tile_m, 1), jnp.float32),   # picked target logit
                ],
            ),
            compiler_params=pltpu.CompilerParams(
                dimension_semantics=("parallel", "arbitrary"),
                vmem_limit_bytes=vmem_limit,
            ),
        )(x, t2)

    loss_sum = jnp.sum(partials)                                  # f32 reduce of partials
    valid_cnt = jnp.sum((t != IGNORE_INDEX).astype(jnp.float32))  # counted in plain JAX
    return (loss_sum / valid_cnt).astype(pred.dtype)


def _reference(pred, target):
    C = pred.shape[-1]
    x = pred.reshape(-1, C).astype(jnp.float32)
    t = target.reshape(-1).astype(jnp.int32)
    logp = jax.nn.log_softmax(x, axis=-1)
    valid = t != IGNORE_INDEX
    t_safe = jnp.where(valid, t, 0)
    nll = -jnp.take_along_axis(logp, t_safe[:, None], axis=-1)[:, 0]
    nll = jnp.where(valid, nll, 0.0)
    return jnp.sum(nll) / jnp.sum(valid.astype(jnp.float32))


if __name__ == "__main__":
    key = jax.random.PRNGKey(0)
    k1, k2, k3, k4, k5, k6 = jax.random.split(key, 6)

    # Case 1: small shapes consistent with the module (B, S, C) = (2, 8, 32); full-C path
    # (statically specialized, scratch-free) with two row blocks.
    B, S, C = 2, 8, 32
    pred = jax.random.normal(k1, (B, S, C), dtype=jnp.float32)
    target = jax.random.randint(k2, (B, S), 0, C, dtype=jnp.int32)
    target = target.at[0, 0].set(IGNORE_INDEX)            # exercise ignore_index masking
    out = jax.block_until_ready(cross_entropy_loss(pred, target))
    ref = _reference(pred, target)
    assert jnp.allclose(out, ref, atol=1e-5, rtol=1e-5), (out, ref)

    # Case 2: class-chunked online-logsumexp path with row-tail AND column-tail masking
    # (tiny per-buffer budget just to exercise the code path at small shapes).
    B2, S2, C2 = 3, 5, 400
    pred2 = jax.random.normal(k3, (B2, S2, C2), dtype=jnp.float32)
    target2 = jax.random.randint(k4, (B2, S2), 0, C2, dtype=jnp.int32)
    target2 = target2.at[1, 2].set(IGNORE_INDEX)
    out2 = jax.block_until_ready(
        cross_entropy_loss(pred2, target2, vmem_tile_bytes=2048))
    ref2 = _reference(pred2, target2)
    assert jnp.allclose(out2, ref2, atol=1e-5, rtol=1e-5), (out2, ref2)

    # Case 3: class-chunked path with C a multiple of tile_c -> mask-free interior chunks
    # (the optimized hot path) and no row mask.
    B3, S3, C3 = 2, 8, 256
    pred3 = jax.random.normal(k5, (B3, S3, C3), dtype=jnp.float32)
    target3 = jax.random.randint(k6, (B3, S3), 0, C3, dtype=jnp.int32)
    out3 = jax.block_until_ready(
        cross_entropy_loss(pred3, target3, vmem_tile_bytes=2048))
    ref3 = _reference(pred3, target3)
    assert jnp.allclose(out3, ref3, atol=1e-5, rtol=1e-5), (out3, ref3)

    print("KERNEL_OK")
</pallas_src>

<mosaic_0001>
module attributes {stable_mosaic.version = 11 : i64} {
  func.func @_ce_kernel_fullc(%arg0: i32, %arg1: memref<8x32xf32, #tpu.memory_space<vmem>>, %arg2: memref<8x1xi32, #tpu.memory_space<vmem>>, %arg3: memref<1x1x1xf32, #tpu.memory_space<vmem>>) attributes {dimension_semantics = [#tpu.dimension_semantics<parallel>], iteration_bounds = array<i64: 2>, scalar_prefetch = 0 : i64, scratch_operands = 0 : i64, tpu.core_type = #tpu.core_type<tc>, window_params = [{transform_indices = @transform_0, window_bounds = array<i64: 8, 32>}, {transform_indices = @transform_1, window_bounds = array<i64: 8, 1>}, {transform_indices = @transform_2, window_bounds = array<i64: 1, 1, 1>}]} {
    %c0 = arith.constant 0 : index
    %c0_0 = arith.constant 0 : index
    %0 = vector.load %arg1[%c0, %c0_0] : memref<8x32xf32, #tpu.memory_space<vmem>>, vector<8x32xf32>
    %c0_1 = arith.constant 0 : index
    %c0_2 = arith.constant 0 : index
    %1 = vector.load %arg2[%c0_1, %c0_2] : memref<8x1xi32, #tpu.memory_space<vmem>>, vector<8x1xi32>
    %cst = arith.constant dense<0xFF800000> : vector<8xf32>
    %2 = vector.multi_reduction <maximumf>, %0, %cst [1] : vector<8x32xf32> to vector<8xf32>
    %3 = vector.shape_cast %2 : vector<8xf32> to vector<8x1xf32>
    %4 = vector.broadcast %3 : vector<8x1xf32> to vector<8x32xf32>
    %5 = arith.subf %0, %4 : vector<8x32xf32>
    %6 = math.exp %5 : vector<8x32xf32>
    %cst_3 = arith.constant dense<0.000000e+00> : vector<8xf32>
    %7 = vector.multi_reduction <add>, %6, %cst_3 [1] : vector<8x32xf32> to vector<8xf32>
    %8 = vector.shape_cast %7 : vector<8xf32> to vector<8x1xf32>
    %9 = math.log %8 : vector<8x1xf32>
    %10 = arith.addf %9, %3 : vector<8x1xf32>
    %11 = tpu.iota {dimensions = array<i32: 1>} : vector<8x32xi32>
    %12 = vector.broadcast %1 : vector<8x1xi32> to vector<8x32xi32>
    %13 = arith.cmpi eq, %11, %12 : vector<8x32xi32>
    %cst_4 = arith.constant 0.000000e+00 : f32
    %14 = vector.broadcast %cst_4 : f32 to vector<8x32xf32>
    %15 = arith.select %13, %0, %14 : vector<8x32xi1>, vector<8x32xf32>
    %cst_5 = arith.constant dense<0.000000e+00> : vector<8xf32>
    %16 = vector.multi_reduction <add>, %15, %cst_5 [1] : vector<8x32xf32> to vector<8xf32>
    %17 = vector.shape_cast %16 : vector<8xf32> to vector<8x1xf32>
    %c-100_i32 = arith.constant -100 : i32
    %18 = vector.broadcast %c-100_i32 : i32 to vector<8x1xi32>
    %19 = arith.cmpi ne, %1, %18 : vector<8x1xi32>
    %20 = arith.subf %10, %17 : vector<8x1xf32>
    %cst_6 = arith.constant 0.000000e+00 : f32
    %21 = vector.broadcast %cst_6 : f32 to vector<8x1xf32>
    %22 = arith.select %19, %20, %21 : vector<8x1xi1>, vector<8x1xf32>
    %23 = vector.shape_cast %22 : vector<8x1xf32> to vector<1x8x1xf32>
    %cst_7 = arith.constant dense<0.000000e+00> : vector<1xf32>
    %24 = vector.multi_reduction <add>, %23, %cst_7 [1, 2] : vector<1x8x1xf32> to vector<1xf32>
    %25 = vector.shape_cast %24 : vector<1xf32> to vector<1x1x1xf32>
    %26 = vector.extract %25[0, 0, 0] : f32 from vector<1x1x1xf32>
    %27 = vector.broadcast %26 : f32 to vector<1x1x1xf32>
    %c0_8 = arith.constant 0 : index
    %c0_9 = arith.constant 0 : index
    %c0_10 = arith.constant 0 : index
    %28 = vector.load %arg3[%c0_8, %c0_9, %c0_10] : memref<1x1x1xf32, #tpu.memory_space<vmem>>, vector<1x1x1xf32>
    tpu.vector_store %arg3[%c0_8, %c0_9, %c0_10], %27 {strides = array<i32>} : memref<1x1x1xf32, #tpu.memory_space<vmem>>, vector<1x1x1xf32>,
    return
  }
  func.func @transform_0(%arg0: i32) -> (i32, i32) {
    %c0_i32 = arith.constant 0 : i32
    %c0_i32_0 = arith.constant 0 : i32
    return %arg0, %c0_i32 : i32, i32
  }
  func.func @transform_1(%arg0: i32) -> (i32, i32) {
    %c0_i32 = arith.constant 0 : i32
    %c0_i32_0 = arith.constant 0 : i32
    return %arg0, %c0_i32 : i32, i32
  }
  func.func @transform_2(%arg0: i32) -> (i32, i32, i32) {
    %c0_i32 = arith.constant 0 : i32
    %c0_i32_0 = arith.constant 0 : i32
    %c0_i32_1 = arith.constant 0 : i32
    return %arg0, %c0_i32, %c0_i32_0 : i32, i32, i32
  }
}

</mosaic_0001>

<llo_original>
// kernel: cross_entropy_loss.1
$region0: #{cross_entropy_loss.1}
  #allocation0 [shape = 'u32[]', space=smem, size = 0x4, offset = 0x4, fixed_abs, tag = 'smem constant byte address 0x4 - core index']
  #allocation1 [shape = 'u32[144,128]{1,0:T(1,128)}', space=vmem, size = 0x12000, scoped, tag = 'internal scratch']
  %s0 = inlined_call_operand.vmem [shape: f32[16,32], index: 0, kind: input, shape index: {}]
  %s1 = inlined_call_operand.vmem [shape: s32[16,1], index: 1, kind: input, shape index: {}]
  %s2 = inlined_call_operand.vmem [shape: f32[2,1,1], index: 2, kind: output, shape index: {}]
  %s3 = sld [smem:[#allocation0]]
  $region41: #{cross_entropy_loss.1} parent=0
    _
  %s5 = ssub.s32 1, %s3
  %s6 = scalar_select 0, %s5, %s3
  loop: start=0, step=1, limit=4
  $region2: #{cross_entropy_loss.1} parent=0 // loop_pre_header
    _
  $region3: #{cross_entropy_loss.1} parent=0 // loop_header
    %s8 = sphi 0, %s12
    %p9 = scmp.ge.s32.totalorder %s8, 4
    %s18 = sphi 0, %s20
    %s21 = sphi 0, %s18
    %s22 = sphi 0, %s21
    %s38 = sphi 0, %s22
    %s44 = sphi 0, %s46
    %s47 = sphi 0, %s44
    %s48 = sphi 0, %s47
    %s64 = sphi 0, %s48
    %s70 = sphi 0, %s72
    %s73 = sphi 0, %s70
    %s74 = sphi 0, %s73
    %s90 = sphi 0, %s74
  $region4: #{cross_entropy_loss.1} parent=0 // loop_header_branch
    %11 = sbr.rel (%p9) target = $region8
  $region5: #{cross_entropy_loss.1} parent=0 // loop_body
    %s13 = ssub.s32 %s8, 1
    %s14 = ssub.s32 %s8, 2
    %s15 = sadd.s32 %s8, 1
    %s16 = ssub.s32 %s8, %s15
    %p17 = scmp.eq.s32.totalorder %s16, 0
    %s19 = sadd.s32 %s18, 1
    %s20 = scalar_select %p17, %s18, %s19
    %p23 = pneg %p17
    %p24 = scmp.eq.s32.totalorder %s8, 1
    %p25 = por %p23, %p24
    %p26 = scmp.ne.s32.totalorder %s18, %s21
    %p27 = scmp.eq.s32.totalorder %s8, 0
    %p28 = por %p26, %p27
    %p29 = scmp.ne.s32.totalorder %s18, %s21
    %p30 = scmp.eq.s32.totalorder %s13, 1
    %p31 = por %p29, %p30
    %p32 = scmp.ne.s32.totalorder %s21, %s22
    %p33 = scmp.eq.s32.totalorder %s13, 0
    %p34 = por %p32, %p33
    %p35 = scmp.ne.s32.totalorder %s21, %s22
    %p36 = scmp.eq.s32.totalorder %s14, 1
    %p37 = por %p35, %p36
    %p39 = scmp.ne.s32.totalorder %s22, %s38
    %p40 = scmp.eq.s32.totalorder %s14, 0
    %p41 = por %p39, %p40
    %s42 = ssub.s32 %s8, %s15
    %p43 = scmp.eq.s32.totalorder %s42, 0
    %s45 = sadd.s32 %s44, 1
    %s46 = scalar_select %p43, %s44, %s45
    %p49 = pneg %p43
    %p50 = scmp.eq.s32.totalorder %s8, 1
    %p51 = por %p49, %p50
    %p52 = scmp.ne.s32.totalorder %s44, %s47
    %p53 = scmp.eq.s32.totalorder %s8, 0
    %p54 = por %p52, %p53
    %p55 = scmp.ne.s32.totalorder %s44, %s47
    %p56 = scmp.eq.s32.totalorder %s13, 1
    %p57 = por %p55, %p56
    %p58 = scmp.ne.s32.totalorder %s47, %s48
    %p59 = scmp.eq.s32.totalorder %s13, 0
    %p60 = por %p58, %p59
    %p61 = scmp.ne.s32.totalorder %s47, %s48
    %p62 = scmp.eq.s32.totalorder %s14, 1
    %p63 = por %p61, %p62
    %p65 = scmp.ne.s32.totalorder %s48, %s64
    %p66 = scmp.eq.s32.totalorder %s14, 0
    %p67 = por %p65, %p66
    %s68 = ssub.s32 %s8, %s15
    %p69 = scmp.eq.s32.totalorder %s68, 0
    %s71 = sadd.s32 %s70, 1
    %s72 = scalar_select %p69, %s70, %s71
    %p75 = pneg %p69
    %p76 = scmp.eq.s32.totalorder %s8, 1
    %p77 = por %p75, %p76
    %p78 = scmp.ne.s32.totalorder %s70, %s73
    %p79 = scmp.eq.s32.totalorder %s8, 0
    %p80 = por %p78, %p79
    %p81 = scmp.ne.s32.totalorder %s70, %s73
    %p82 = scmp.eq.s32.totalorder %s13, 1
    %p83 = por %p81, %p82
    %p84 = scmp.ne.s32.totalorder %s73, %s74
    %p85 = scmp.eq.s32.totalorder %s13, 0
    %p86 = por %p84, %p85
    %p87 = scmp.ne.s32.totalorder %s73, %s74
    %p88 = scmp.eq.s32.totalorder %s14, 1
    %p89 = por %p87, %p88
    %p91 = scmp.ne.s32.totalorder %s74, %s90
    %p92 = scmp.eq.s32.totalorder %s14, 0
    %p93 = por %p91, %p92
    %p94 = scmp.le.s32.totalorder 1, %s8
    %p95 = scmp.lt.s32.totalorder %s8, 3
    %p96 = pnand %p94, %p95
    %p97 = pneg %p96
    // Predicated region
    $region9: #{cross_entropy_loss.1} parent=5 // pred_check
      _
    $region10: #{cross_entropy_loss.1} parent=5 // pred_check_branch
      %99 = sbr.rel (%p96) target = $region12
    $region11: #{cross_entropy_loss.1} parent=5 // pred_region
      %s100 = ssub.s32 %s8, 1
    $region12: #{cross_entropy_loss.1} parent=5 // pred_fallthru
      _
    %p101 = scmp.lt.s32.totalorder %s8, 2
    // Predicated region
    $region13: #{cross_entropy_loss.1} parent=5 // pred_check
      %p102 = pneg %p101
    $region14: #{cross_entropy_loss.1} parent=5 // pred_check_branch
      %104 = sbr.rel (%p102) target = $region16
    $region15: #{cross_entropy_loss.1} parent=5 // pred_region
      // Predicated region
      $region17: #{cross_entropy_loss.1} parent=15 // pred_check
        %p105 = pneg %p28
      $region18: #{cross_entropy_loss.1} parent=15 // pred_check_branch
        %107 = sbr.rel (%p105) target = $region20
      $region19: #{cross_entropy_loss.1} parent=15 // pred_region
        %p108 = scmp.lt.s32.totalorder %s8, 1
        %s109 = scalar_select %p108, %s8, 1
        %s110 = smul.addr %s109, 8
        %s111 = scalar_lea.vmem %s0, %s110
      $region20: #{cross_entropy_loss.1} parent=15 // pred_fallthru
        _
      // Predicated region
      $region21: #{cross_entropy_loss.1} parent=15 // pred_check
        %p112 = pneg %p54
      $region22: #{cross_entropy_loss.1} parent=15 // pred_check_branch
        %114 = sbr.rel (%p112) target = $region24
      $region23: #{cross_entropy_loss.1} parent=15 // pred_region
        %p115 = scmp.lt.s32.totalorder %s8, 1
        %s116 = scalar_select %p115, %s8, 1
        %s117 = smul.addr %s116, 8
        %s118 = scalar_lea.vmem %s1, %s117
      $region24: #{cross_entropy_loss.1} parent=15 // pred_fallthru
        _
    $region16: #{cross_entropy_loss.1} parent=5 // pred_fallthru
      _
    %p119 = scmp.le.s32.totalorder 1, %s8
    %p120 = scmp.lt.s32.totalorder %s8, 3
    %p121 = pnand %p119, %p120
    %p122 = pneg %p121
    // Predicated region
    $region25: #{cross_entropy_loss.1} parent=5 // pred_check
      _
    $region26: #{cross_entropy_loss.1} parent=5 // pred_check_branch
      %124 = sbr.rel (%p121) target = $region28
    $region27: #{cross_entropy_loss.1} parent=5 // pred_region
      %s125 = ssub.s32 %s8, 1
      %p126 = scmp.lt.s32.totalorder %s13, 1
      %s127 = scalar_select %p126, %s13, 1
      %s128 = smul.addr %s127, 8
      %s129 = scalar_lea.vmem %s0, %s128
      %p130 = pneg %p34
      %p131 = pneg %p31
      %p132 = scmp.lt.s32.totalorder %s13, 1
      %s133 = scalar_select %p132, %s13, 1
      %s134 = smul.addr %s133, 8
      %s135 = scalar_lea.vmem %s1, %s134
      %p136 = pneg %p60
      %p137 = pneg %p57
      %p138 = pneg %p86
      %p139 = pneg %p83
      %p140 = scmp.lt.s32.totalorder %s13, 1
      %s141 = scalar_select %p140, %s13, 1
      %s142 = scalar_lea.vmem %s2, %s141
      %p143 = scmp.lt.s32.totalorder %s13, 1
      %s144 = scalar_select %p143, %s13, 1
      %s145 = smul.addr %s144, 8
      %s146 = scalar_lea.vmem %s0, %s145
      %p147 = scmp.lt.s32.totalorder %s13, 1
      %s148 = scalar_select %p147, %s13, 1
      %s149 = smul.addr %s148, 8
      %s150 = scalar_lea.vmem %s1, %s149
      %p151 = scmp.lt.s32.totalorder %s13, 1
      %s152 = scalar_select %p151, %s13, 1
      %s153 = scalar_lea.vmem %s2, %s152
      %v154 = vld [vmem:[%s146] sm:$0xff]
      %v155 = vld [vmem:[%s150] sm:$0xff]
      %vm156 = vcmask 261120
      %v157 = vsel %vm156, %v154, -inf
      %158 = vmax.xlane.f32.xlu0 %v157
      %v159 = vpop.xlane.xlu0 %158
      %v160 = vsub.f32 %v154, %v159
      %v161 = vmul.f32 %v160, 1.442695
      %v162 = vpow.pop %v161
      %v163 = vsel %vm156, %v162, 0.0
      %164 = vadd.xlane.f32.xlu0 %v163
      %v165 = vpop.xlane.xlu0 %164
      %v166 = vlog2.pop %v165
      %v167 = vmul.f32 %v166, 0.6931472
      %v168 = vadd.f32 %v167, %v159
      %v169 = vlaneseq
      %v170 = vand.u32 %v169, 127
      %171 = vset.pattern.permute.xlu0 0
      %172 = vperm.xlu0 %171, %v155
      %v173 = vpop.permute.xlu0 %172
      %vm174 = vcmp.eq.s32.totalorder %v170, %v173
      %v175 = vsel %vm174, %v154, 0.0
      %v176 = vsel %vm156, %v175, 0.0
      %177 = vadd.xlane.f32.xlu0 %v176
      %v178 = vpop.xlane.xlu0 %177
      %vm179 = vcmp.ne.s32.totalorder %v155, 4294967196
      %v180 = vsub.f32 %v168, %v178
      %v181 = vsel %vm179, %v180, 0.0
      %vm182 = vcmask 7168
      %v183 = vsel %vm182, %v181, 0.0
      %184 = vadd.xlane.f32.xlu0 %v183
      %v185 = vpop.xlane.xlu0 %184
      %v186 = vrot.slane %v185, 4
      %v187 = vadd.f32 %v185, %v186
      %v188 = vrot.slane %v187, 2
      %v189 = vadd.f32 %v187, %v188
      %v190 = vrot.slane %v189, 1
      %v191 = vadd.f32 %v189, %v190
      %s192 = vtos %v191
      %v193 = vstv %s192
      %vm194 = vcmask 0
      %195 = vst.msk [vmem:[%s153] sm:$0x1] %vm194, %v193
      %p196 = scmp.lt.s32.totalorder %s13, 1
      %s197 = scalar_select %p196, %s13, 1
      %s198 = scalar_lea.vmem %s2, %s197
      // Predicated region
      $region29: #{cross_entropy_loss.1} parent=27 // pred_check
        %p199 = pneg %p83
      $region30: #{cross_entropy_loss.1} parent=27 // pred_check_branch
        %201 = sbr.rel (%p199) target = $region32
      $region31: #{cross_entropy_loss.1} parent=27 // pred_region
        _
      $region32: #{cross_entropy_loss.1} parent=27 // pred_fallthru
        _
    $region28: #{cross_entropy_loss.1} parent=5 // pred_fallthru
      _
    %p202 = scmp.le.s32.totalorder 2, %s8
    // Predicated region
    $region33: #{cross_entropy_loss.1} parent=5 // pred_check
      %p203 = pneg %p202
    $region34: #{cross_entropy_loss.1} parent=5 // pred_check_branch
      %205 = sbr.rel (%p203) target = $region36
    $region35: #{cross_entropy_loss.1} parent=5 // pred_region
      %s206 = ssub.s32 %s8, 2
      // Predicated region
      $region37: #{cross_entropy_loss.1} parent=35 // pred_check
        %p207 = pneg %p89
      $region38: #{cross_entropy_loss.1} parent=35 // pred_check_branch
        %209 = sbr.rel (%p207) target = $region40
      $region39: #{cross_entropy_loss.1} parent=35 // pred_region
        %p210 = scmp.lt.s32.totalorder %s14, 1
        %s211 = scalar_select %p210, %s14, 1
        %s212 = scalar_lea.vmem %s2, %s211
      $region40: #{cross_entropy_loss.1} parent=35 // pred_fallthru
        _
    $region36: #{cross_entropy_loss.1} parent=5 // pred_fallthru
      _
  $region6: #{cross_entropy_loss.1} parent=0 // loop_footer
    %s12 = sadd.s32 1, %s8
  $region7: #{cross_entropy_loss.1} parent=0 // loop_footer_branch
    %7 = sbr.rel target = $region3
  $region8: #{cross_entropy_loss.1} parent=0 // loop_exit
    _

</llo_original>
